<compile_context>
chip_gen: v6e
topology: v6e:2x2x1
jax: 0.10.0
libtpu: 0.0.40
codegen_flags: <defaults>
</compile_context>

<pallas_src>
import functools

import jax
import jax.numpy as jnp
from jax.experimental import pallas as pl
from jax.experimental.pallas import tpu as pltpu


# ----------------------------------------------------------------------------
# Kernels
# ----------------------------------------------------------------------------
def _sage_layer_kernel(a_ref, xn_ref, xs_ref, w_ref, b_ref, o_ref, acc_ref):
    """One SAGEConv layer + ReLU, tiled over the node dimension.

    grid = (N/TM rows ["parallel"], N/TK reduction ["arbitrary"])

    a_ref  : [TM, TK]       bf16  row-normalized adjacency tile
    xn_ref : [TK, Dp]       bf16  neighbor-node features (reduction rows)
    xs_ref : [TM, Dp]       bf16  self-node features (output rows)
    w_ref  : [2*Dp, Hp]     bf16  [W_l ; W_r] stacked along the contraction dim
    b_ref  : [1, Hp]        f32   lin_l bias
    o_ref  : [TM, Hp]       bf16  output tile
    acc_ref: [TM, Dp]       f32   VMEM accumulator for the neighbor mean
    """
    k = pl.program_id(1)

    @pl.when(k == 0)
    def _():
        acc_ref[...] = jnp.zeros_like(acc_ref)

    # Neighbor-mean aggregation: acc += A_tile @ x_tile   (bf16 MXU, f32 acc)
    acc_ref[...] += jnp.dot(a_ref[...], xn_ref[...],
                            preferred_element_type=jnp.float32)

    @pl.when(k == pl.num_programs(1) - 1)
    def _():
        # Fused projection: [agg | x_self] @ [W_l ; W_r]  (one MXU pass, K=2*Dp)
        feats = jnp.concatenate(
            [acc_ref[...].astype(jnp.bfloat16), xs_ref[...]], axis=-1)
        h = jnp.dot(feats, w_ref[...], preferred_element_type=jnp.float32)
        h = h + b_ref[...]
        o_ref[...] = jnp.maximum(h, 0.0).astype(o_ref.dtype)


def _pool_linear_kernel(p_ref, x_ref, w_ref, b_ref, o_ref, acc_ref):
    """global_mean_pool + (eval-mode dropout) + final Linear.

    grid = (N/TK,)  reduction over node tiles.

    p_ref  : [Gp, TK]   bf16  mean-pooling matrix tile
    x_ref  : [TK, Hp]   bf16  node features after SAGE layers
    w_ref  : [Hp, Op]   bf16  final linear weight (x @ W layout)
    b_ref  : [1, Op]    f32   final linear bias
    o_ref  : [Gp, Op]   f32
    acc_ref: [Gp, Hp]   f32   pooled-features accumulator
    """
    k = pl.program_id(0)

    @pl.when(k == 0)
    def _():
        acc_ref[...] = jnp.zeros_like(acc_ref)

    acc_ref[...] += jnp.dot(p_ref[...], x_ref[...],
                            preferred_element_type=jnp.float32)

    @pl.when(k == pl.num_programs(0) - 1)
    def _():
        # dropout p=0.5 in eval mode -> identity
        out = jnp.dot(acc_ref[...].astype(jnp.bfloat16), w_ref[...],
                      preferred_element_type=jnp.float32)
        o_ref[...] = out + b_ref[...]


# ----------------------------------------------------------------------------
# Wrappers
# ----------------------------------------------------------------------------
_VMEM_LIMIT = 32 * 1024 * 1024  # explicit scoped-VMEM budget, safe on v5e/v6e/v7x


def sage_layer(x_pad, a_pad, w_cat, b_l, *, tm, tk):
    n_pad, din_pad = x_pad.shape
    h_pad = w_cat.shape[1]
    grid = (n_pad // tm, n_pad // tk)

    flops = 2 * n_pad * n_pad * din_pad + 2 * n_pad * (2 * din_pad) * h_pad
    bytes_accessed = (a_pad.size * 2 + 2 * x_pad.size * 2 + w_cat.size * 2
                      + b_l.size * 4 + n_pad * h_pad * 2)

    return pl.pallas_call(
        _sage_layer_kernel,
        out_shape=jax.ShapeDtypeStruct((n_pad, h_pad), jnp.bfloat16),
        grid_spec=pltpu.PrefetchScalarGridSpec(
            num_scalar_prefetch=0,
            grid=grid,
            in_specs=[
                pl.BlockSpec((tm, tk), lambda i, k: (i, k)),        # A_mean
                pl.BlockSpec((tk, din_pad), lambda i, k: (k, 0)),   # x (neighbors)
                pl.BlockSpec((tm, din_pad), lambda i, k: (i, 0)),   # x (self rows)
                pl.BlockSpec((2 * din_pad, h_pad), lambda i, k: (0, 0)),
                pl.BlockSpec((1, h_pad), lambda i, k: (0, 0)),
            ],
            out_specs=pl.BlockSpec((tm, h_pad), lambda i, k: (i, 0)),
            scratch_shapes=[pltpu.VMEM((tm, din_pad), jnp.float32)],
        ),
        compiler_params=pltpu.CompilerParams(
            dimension_semantics=("parallel", "arbitrary"),
            vmem_limit_bytes=_VMEM_LIMIT,
        ),
        cost_estimate=pl.CostEstimate(
            flops=flops, transcendentals=0, bytes_accessed=bytes_accessed),
    )(a_pad, x_pad, x_pad, w_cat, b_l)


def pool_linear(x_pad, p_pad, w_pad, b_pad, *, tk):
    n_pad, h_pad = x_pad.shape
    g_pad = p_pad.shape[0]
    o_pad = w_pad.shape[1]
    grid = (n_pad // tk,)

    flops = 2 * g_pad * n_pad * h_pad + 2 * g_pad * h_pad * o_pad
    bytes_accessed = (p_pad.size * 2 + x_pad.size * 2 + w_pad.size * 2
                      + b_pad.size * 4 + g_pad * o_pad * 4)

    return pl.pallas_call(
        _pool_linear_kernel,
        out_shape=jax.ShapeDtypeStruct((g_pad, o_pad), jnp.float32),
        grid_spec=pltpu.PrefetchScalarGridSpec(
            num_scalar_prefetch=0,
            grid=grid,
            in_specs=[
                pl.BlockSpec((g_pad, tk), lambda k: (0, k)),
                pl.BlockSpec((tk, h_pad), lambda k: (k, 0)),
                pl.BlockSpec((h_pad, o_pad), lambda k: (0, 0)),
                pl.BlockSpec((1, o_pad), lambda k: (0, 0)),
            ],
            out_specs=pl.BlockSpec((g_pad, o_pad), lambda k: (0, 0)),
            scratch_shapes=[pltpu.VMEM((g_pad, h_pad), jnp.float32)],
        ),
        compiler_params=pltpu.CompilerParams(
            dimension_semantics=("arbitrary",),
            vmem_limit_bytes=_VMEM_LIMIT,
        ),
        cost_estimate=pl.CostEstimate(
            flops=flops, transcendentals=0, bytes_accessed=bytes_accessed),
    )(p_pad, x_pad, w_pad, b_pad)


# ----------------------------------------------------------------------------
# Glue: densify graph structure, padding, parameter init, full forward
# ----------------------------------------------------------------------------
def _round_up(x, m):
    return (x + m - 1) // m * m


def _pad2d(a, rows, cols):
    return jnp.pad(a, ((0, rows - a.shape[0]), (0, cols - a.shape[1])))


def build_mean_adjacency(edge_index, num_nodes):
    """A_mean[i, j] = 1/deg_in(i) if edge j->i, else 0 (isolated nodes -> 0)."""
    src, dst = edge_index[0], edge_index[1]
    adj = jnp.zeros((num_nodes, num_nodes), jnp.float32)
    adj = adj.at[dst, src].add(1.0)
    deg = adj.sum(axis=1, keepdims=True)
    return adj / jnp.maximum(deg, 1.0)


def build_pool_matrix(batch, num_nodes, num_graphs):
    """P[g, n] = 1/|graph g| if batch[n] == g, else 0."""
    onehot = (batch[None, :] == jnp.arange(num_graphs)[:, None]).astype(jnp.float32)
    counts = onehot.sum(axis=1, keepdims=True)
    return onehot / jnp.maximum(counts, 1.0)


def init_params(key, input_dim, hidden_dim, output_dim, num_layers):
    """Deterministic parameter init (uniform, Linear-style fan_in scaling)."""
    params = []
    dims_in = [input_dim] + [hidden_dim] * (num_layers - 2)
    for din in dims_in:
        key, k1, k2, k3 = jax.random.split(key, 4)
        bound = 1.0 / jnp.sqrt(din)
        params.append(dict(
            w_l=jax.random.uniform(k1, (din, hidden_dim), jnp.float32, -bound, bound),
            b_l=jax.random.uniform(k2, (1, hidden_dim), jnp.float32, -bound, bound),
            w_r=jax.random.uniform(k3, (din, hidden_dim), jnp.float32, -bound, bound),
        ))
    key, k1, k2 = jax.random.split(key, 3)
    bound = 1.0 / jnp.sqrt(hidden_dim)
    lin = dict(
        w=jax.random.uniform(k1, (hidden_dim, output_dim), jnp.float32, -bound, bound),
        b=jax.random.uniform(k2, (1, output_dim), jnp.float32, -bound, bound),
    )
    return params, lin


LANE = 128


@functools.partial(jax.jit, static_argnums=(5,))
def sage_forward(x, edge_index, batch, sage_params, lin_params, num_graphs):
    n, din = x.shape
    hidden = sage_params[0]["w_l"].shape[1]
    out_dim = lin_params["w"].shape[1]

    # Node-axis tiling: 256-wide tiles fill the v6e/v7x MXU; small graphs use a
    # single full-size (128-aligned) block.
    if n <= 256:
        n_pad = _round_up(n, LANE)
        tm = tk = n_pad
    else:
        tm = tk = 256
        n_pad = _round_up(n, 256)

    din_pad = _round_up(din, LANE)
    h_pad = _round_up(hidden, LANE)
    o_pad = _round_up(out_dim, LANE)
    g_pad = _round_up(num_graphs, 8)

    a_pad = _pad2d(build_mean_adjacency(edge_index, n), n_pad, n_pad)
    a_pad = a_pad.astype(jnp.bfloat16)
    p_pad = _pad2d(build_pool_matrix(batch, n, num_graphs), g_pad, n_pad)
    p_pad = p_pad.astype(jnp.bfloat16)

    h = _pad2d(x, n_pad, din_pad).astype(jnp.bfloat16)
    for p in sage_params:
        dcur_pad = _round_up(p["w_l"].shape[0], LANE)
        # Fuse W_l / W_r into a single contraction (K = 2 * Din_pad).
        # NOTE: with padded Din == H the aggregate-then-project order is optimal;
        # for Din >> H a project-first variant would shrink the N^2 matmul.
        w_cat = jnp.concatenate(
            [_pad2d(p["w_l"], dcur_pad, h_pad),
             _pad2d(p["w_r"], dcur_pad, h_pad)], axis=0).astype(jnp.bfloat16)
        b_l = _pad2d(p["b_l"], 1, h_pad)
        h = sage_layer(h, a_pad, w_cat, b_l, tm=tm, tk=tk)

    w = _pad2d(lin_params["w"], h_pad, o_pad).astype(jnp.bfloat16)
    b = _pad2d(lin_params["b"], 1, o_pad)
    out_pad = pool_linear(h, p_pad, w, b, tk=tk)
    return out_pad[:num_graphs, :out_dim]


# ----------------------------------------------------------------------------
if __name__ == "__main__":
    key = jax.random.PRNGKey(0)

    # Small synthetic graph batch: 2 graphs, 8 nodes each, 16 nodes total.
    num_nodes = 16
    num_graphs = 2
    input_dim, hidden_dim, output_dim, num_layers = 8, 32, 4, 3

    key, kx = jax.random.split(key)
    x = jax.random.normal(kx, (num_nodes, input_dim), jnp.float32)

    # Ring edges within each graph (both directions) -> edge_index [2, E]
    src, dst = [], []
    nodes_per_graph = num_nodes // num_graphs
    for g in range(num_graphs):
        base = g * nodes_per_graph
        for i in range(nodes_per_graph):
            a = base + i
            b = base + (i + 1) % nodes_per_graph
            src += [a, b]
            dst += [b, a]
    edge_index = jnp.array([src, dst], dtype=jnp.int32)

    batch = jnp.repeat(jnp.arange(num_graphs, dtype=jnp.int32), nodes_per_graph)

    sage_params, lin_params = init_params(
        key, input_dim, hidden_dim, output_dim, num_layers)

    out = sage_forward(x, edge_index, batch, sage_params, lin_params, num_graphs)
    out = jax.block_until_ready(out)
    assert out.shape == (num_graphs, output_dim)
    print("KERNEL_OK")
</pallas_src>

<mosaic_0001>
module attributes {stable_mosaic.version = 11 : i64} {
  func.func private @main(%arg0: i32) attributes {dimension_semantics = [#tpu.dimension_semantics<core_parallel>], iteration_bounds = array<i64: 2>, tpu.core_type = #tpu.core_type<sc_scalar_subcore>, window_params = []} {
    return
  }
}

module attributes {stable_mosaic.version = 11 : i64} {
  func.func private @main(%arg0: i32) attributes {dimension_semantics = [#tpu.dimension_semantics<core_parallel>], iteration_bounds = array<i64: 2>, tpu.core_type = #tpu.core_type<sc_scalar_subcore>, window_params = []} {
    return
  }
}

module attributes {stable_mosaic.version = 11 : i64} {
  func.func @_pool_linear_kernel(%arg0: i32, %arg1: memref<8x128xbf16, #tpu.memory_space<vmem>>, %arg2: memref<128x128xbf16, #tpu.memory_space<vmem>>, %arg3: memref<128x128xbf16, #tpu.memory_space<vmem>>, %arg4: memref<1x128xf32, #tpu.memory_space<vmem>>, %arg5: memref<8x128xf32, #tpu.memory_space<vmem>>, %arg6: memref<8x128xf32, #tpu.memory_space<vmem>>) attributes {dimension_semantics = [#tpu.dimension_semantics<arbitrary>], iteration_bounds = array<i64: 1>, scalar_prefetch = 0 : i64, scratch_operands = 1 : i64, tpu.core_type = #tpu.core_type<tc>, window_params = [{transform_indices = @transform_0, window_bounds = array<i64: 8, 128>}, {transform_indices = @transform_1, window_bounds = array<i64: 128, 128>}, {pipeline_mode = #tpu.pipeline_mode<synchronous>, transform_indices = @transform_2, window_bounds = array<i64: 128, 128>}, {pipeline_mode = #tpu.pipeline_mode<synchronous>, transform_indices = @transform_3, window_bounds = array<i64: 1, 128>}, {pipeline_mode = #tpu.pipeline_mode<synchronous>, transform_indices = @transform_4, window_bounds = array<i64: 8, 128>}]} {
    %c0_i32 = arith.constant 0 : i32
    %0 = arith.cmpi eq, %arg0, %c0_i32 : i32
    %1 = arith.extui %0 : i1 to i32
    %c0_i32_0 = arith.constant 0 : i32
    %2 = arith.cmpi ne, %1, %c0_i32_0 : i32
    scf.if %2 {
      %cst_10 = arith.constant 0.000000e+00 : f32
      %12 = vector.broadcast %cst_10 : f32 to vector<8x128xf32>
      %c0_11 = arith.constant 0 : index
      %c0_12 = arith.constant 0 : index
      %13 = vector.load %arg6[%c0_11, %c0_12] : memref<8x128xf32, #tpu.memory_space<vmem>>, vector<8x128xf32>
      tpu.vector_store %arg6[%c0_11, %c0_12], %12 {strides = array<i32>} : memref<8x128xf32, #tpu.memory_space<vmem>>, vector<8x128xf32>,
    } else {
    }
    %c0 = arith.constant 0 : index
    %c0_1 = arith.constant 0 : index
    %3 = vector.load %arg6[%c0, %c0_1] : memref<8x128xf32, #tpu.memory_space<vmem>>, vector<8x128xf32>
    %c0_2 = arith.constant 0 : index
    %c0_3 = arith.constant 0 : index
    %4 = vector.load %arg1[%c0_2, %c0_3] : memref<8x128xbf16, #tpu.memory_space<vmem>>, vector<8x128xbf16>
    %c0_4 = arith.constant 0 : index
    %c0_5 = arith.constant 0 : index
    %5 = vector.load %arg2[%c0_4, %c0_5] : memref<128x128xbf16, #tpu.memory_space<vmem>>, vector<128x128xbf16>
    %cst = arith.constant dense<0.000000e+00> : vector<8x128xf32>
    %6 = tpu.matmul %4, %5, %cst {dimension_numbers = #tpu.dot_dimension_numbers<[1], [0], [0], [1], [0, 0, 1, 1], [], []>} : vector<8x128xbf16>, vector<128x128xbf16>, vector<8x128xf32> -> vector<8x128xf32>
    %7 = arith.addf %3, %6 : vector<8x128xf32>
    %c0_6 = arith.constant 0 : index
    %c0_7 = arith.constant 0 : index
    %8 = vector.load %arg6[%c0_6, %c0_7] : memref<8x128xf32, #tpu.memory_space<vmem>>, vector<8x128xf32>
    tpu.vector_store %arg6[%c0_6, %c0_7], %7 {strides = array<i32>} : memref<8x128xf32, #tpu.memory_space<vmem>>, vector<8x128xf32>,
    %c0_i32_8 = arith.constant 0 : i32
    %9 = arith.cmpi eq, %arg0, %c0_i32_8 : i32
    %10 = arith.extui %9 : i1 to i32
    %c0_i32_9 = arith.constant 0 : i32
    %11 = arith.cmpi ne, %10, %c0_i32_9 : i32
    scf.if %11 {
      %c0_10 = arith.constant 0 : index
      %c0_11 = arith.constant 0 : index
      %12 = vector.load %arg6[%c0_10, %c0_11] : memref<8x128xf32, #tpu.memory_space<vmem>>, vector<8x128xf32>
      %13 = arith.truncf %12 : vector<8x128xf32> to vector<8x128xbf16>
      %c0_12 = arith.constant 0 : index
      %c0_13 = arith.constant 0 : index
      %14 = vector.load %arg3[%c0_12, %c0_13] : memref<128x128xbf16, #tpu.memory_space<vmem>>, vector<128x128xbf16>
      %cst_14 = arith.constant dense<0.000000e+00> : vector<8x128xf32>
      %15 = tpu.matmul %13, %14, %cst_14 {dimension_numbers = #tpu.dot_dimension_numbers<[1], [0], [0], [1], [0, 0, 1, 1], [], []>} : vector<8x128xbf16>, vector<128x128xbf16>, vector<8x128xf32> -> vector<8x128xf32>
      %c0_15 = arith.constant 0 : index
      %c0_16 = arith.constant 0 : index
      %16 = vector.load %arg4[%c0_15, %c0_16] : memref<1x128xf32, #tpu.memory_space<vmem>>, vector<1x128xf32>
      %17 = vector.broadcast %16 : vector<1x128xf32> to vector<8x128xf32>
      %18 = arith.addf %15, %17 : vector<8x128xf32>
      %c0_17 = arith.constant 0 : index
      %c0_18 = arith.constant 0 : index
      %19 = vector.load %arg5[%c0_17, %c0_18] : memref<8x128xf32, #tpu.memory_space<vmem>>, vector<8x128xf32>
      tpu.vector_store %arg5[%c0_17, %c0_18], %18 {strides = array<i32>} : memref<8x128xf32, #tpu.memory_space<vmem>>, vector<8x128xf32>,
    } else {
    }
    return
  }
  func.func @transform_0(%arg0: i32) -> (i32, i32) {
    %c0_i32 = arith.constant 0 : i32
    %c0_i32_0 = arith.constant 0 : i32
    return %c0_i32, %arg0 : i32, i32
  }
  func.func @transform_1(%arg0: i32) -> (i32, i32) {
    %c0_i32 = arith.constant 0 : i32
    %c0_i32_0 = arith.constant 0 : i32
    return %arg0, %c0_i32 : i32, i32
  }
  func.func @transform_2(%arg0: i32) -> (i32, i32) {
    %c0_i32 = arith.constant 0 : i32
    %c0_i32_0 = arith.constant 0 : i32
    %c0_i32_1 = arith.constant 0 : i32
    return %c0_i32, %c0_i32_0 : i32, i32
  }
  func.func @transform_3(%arg0: i32) -> (i32, i32) {
    %c0_i32 = arith.constant 0 : i32
    %c0_i32_0 = arith.constant 0 : i32
    %c0_i32_1 = arith.constant 0 : i32
    return %c0_i32, %c0_i32_0 : i32, i32
  }
  func.func @transform_4(%arg0: i32) -> (i32, i32) {
    %c0_i32 = arith.constant 0 : i32
    %c0_i32_0 = arith.constant 0 : i32
    %c0_i32_1 = arith.constant 0 : i32
    return %c0_i32, %c0_i32_0 : i32, i32
  }
}

module attributes {stable_mosaic.version = 11 : i64} {
  func.func @_sage_layer_kernel(%arg0: i32, %arg1: i32, %arg2: memref<128x128xbf16, #tpu.memory_space<vmem>>, %arg3: memref<128x128xbf16, #tpu.memory_space<vmem>>, %arg4: memref<128x128xbf16, #tpu.memory_space<vmem>>, %arg5: memref<256x128xbf16, #tpu.memory_space<vmem>>, %arg6: memref<1x128xf32, #tpu.memory_space<vmem>>, %arg7: memref<128x128xbf16, #tpu.memory_space<vmem>>, %arg8: memref<128x128xf32, #tpu.memory_space<vmem>>) attributes {dimension_semantics = [#tpu.dimension_semantics<parallel>, #tpu.dimension_semantics<arbitrary>], iteration_bounds = array<i64: 1, 1>, scalar_prefetch = 0 : i64, scratch_operands = 1 : i64, tpu.core_type = #tpu.core_type<tc>, window_params = [{transform_indices = @transform_0, window_bounds = array<i64: 128, 128>}, {transform_indices = @transform_1, window_bounds = array<i64: 128, 128>}, {transform_indices = @transform_2, window_bounds = array<i64: 128, 128>}, {pipeline_mode = #tpu.pipeline_mode<synchronous>, transform_indices = @transform_3, window_bounds = array<i64: 256, 128>}, {pipeline_mode = #tpu.pipeline_mode<synchronous>, transform_indices = @transform_4, window_bounds = array<i64: 1, 128>}, {transform_indices = @transform_5, window_bounds = array<i64: 128, 128>}]} {
    %c0_i32 = arith.constant 0 : i32
    %0 = arith.cmpi eq, %arg1, %c0_i32 : i32
    %1 = arith.extui %0 : i1 to i32
    %c0_i32_0 = arith.constant 0 : i32
    %2 = arith.cmpi ne, %1, %c0_i32_0 : i32
    scf.if %2 {
      %cst_10 = arith.constant 0.000000e+00 : f32
      %12 = vector.broadcast %cst_10 : f32 to vector<128x128xf32>
      %c0_11 = arith.constant 0 : index
      %c0_12 = arith.constant 0 : index
      %13 = vector.load %arg8[%c0_11, %c0_12] : memref<128x128xf32, #tpu.memory_space<vmem>>, vector<128x128xf32>
      tpu.vector_store %arg8[%c0_11, %c0_12], %12 {strides = array<i32>} : memref<128x128xf32, #tpu.memory_space<vmem>>, vector<128x128xf32>,
    } else {
    }
    %c0 = arith.constant 0 : index
    %c0_1 = arith.constant 0 : index
    %3 = vector.load %arg8[%c0, %c0_1] : memref<128x128xf32, #tpu.memory_space<vmem>>, vector<128x128xf32>
    %c0_2 = arith.constant 0 : index
    %c0_3 = arith.constant 0 : index
    %4 = vector.load %arg2[%c0_2, %c0_3] : memref<128x128xbf16, #tpu.memory_space<vmem>>, vector<128x128xbf16>
    %c0_4 = arith.constant 0 : index
    %c0_5 = arith.constant 0 : index
    %5 = vector.load %arg3[%c0_4, %c0_5] : memref<128x128xbf16, #tpu.memory_space<vmem>>, vector<128x128xbf16>
    %cst = arith.constant dense<0.000000e+00> : vector<128x128xf32>
    %6 = tpu.matmul %4, %5, %cst {dimension_numbers = #tpu.dot_dimension_numbers<[1], [0], [0], [1], [0, 0, 1, 1], [], []>} : vector<128x128xbf16>, vector<128x128xbf16>, vector<128x128xf32> -> vector<128x128xf32>
    %7 = arith.addf %3, %6 : vector<128x128xf32>
    %c0_6 = arith.constant 0 : index
    %c0_7 = arith.constant 0 : index
    %8 = vector.load %arg8[%c0_6, %c0_7] : memref<128x128xf32, #tpu.memory_space<vmem>>, vector<128x128xf32>
    tpu.vector_store %arg8[%c0_6, %c0_7], %7 {strides = array<i32>} : memref<128x128xf32, #tpu.memory_space<vmem>>, vector<128x128xf32>,
    %c0_i32_8 = arith.constant 0 : i32
    %9 = arith.cmpi eq, %arg1, %c0_i32_8 : i32
    %10 = arith.extui %9 : i1 to i32
    %c0_i32_9 = arith.constant 0 : i32
    %11 = arith.cmpi ne, %10, %c0_i32_9 : i32
    scf.if %11 {
      %c0_10 = arith.constant 0 : index
      %c0_11 = arith.constant 0 : index
      %12 = vector.load %arg8[%c0_10, %c0_11] : memref<128x128xf32, #tpu.memory_space<vmem>>, vector<128x128xf32>
      %13 = arith.truncf %12 : vector<128x128xf32> to vector<128x128xbf16>
      %c0_12 = arith.constant 0 : index
      %c0_13 = arith.constant 0 : index
      %14 = vector.load %arg4[%c0_12, %c0_13] : memref<128x128xbf16, #tpu.memory_space<vmem>>, vector<128x128xbf16>
      %15 = tpu.concatenate %13, %14 in 1 : vector<128x128xbf16>, vector<128x128xbf16> -> vector<128x256xbf16>
      %c0_14 = arith.constant 0 : index
      %c0_15 = arith.constant 0 : index
      %16 = vector.load %arg5[%c0_14, %c0_15] : memref<256x128xbf16, #tpu.memory_space<vmem>>, vector<256x128xbf16>
      %cst_16 = arith.constant dense<0.000000e+00> : vector<128x128xf32>
      %17 = tpu.matmul %15, %16, %cst_16 {dimension_numbers = #tpu.dot_dimension_numbers<[1], [0], [0], [1], [0, 0, 1, 1], [], []>} : vector<128x256xbf16>, vector<256x128xbf16>, vector<128x128xf32> -> vector<128x128xf32>
      %c0_17 = arith.constant 0 : index
      %c0_18 = arith.constant 0 : index
      %18 = vector.load %arg6[%c0_17, %c0_18] : memref<1x128xf32, #tpu.memory_space<vmem>>, vector<1x128xf32>
      %19 = vector.broadcast %18 : vector<1x128xf32> to vector<128x128xf32>
      %20 = arith.addf %17, %19 : vector<128x128xf32>
      %cst_19 = arith.constant 0.000000e+00 : f32
      %21 = vector.broadcast %cst_19 : f32 to vector<128x128xf32>
      %22 = arith.maximumf %20, %21 : vector<128x128xf32>
      %23 = arith.truncf %22 : vector<128x128xf32> to vector<128x128xbf16>
      %c0_20 = arith.constant 0 : index
      %c0_21 = arith.constant 0 : index
      %24 = vector.load %arg7[%c0_20, %c0_21] : memref<128x128xbf16, #tpu.memory_space<vmem>>, vector<128x128xbf16>
      tpu.vector_store %arg7[%c0_20, %c0_21], %23 {strides = array<i32>} : memref<128x128xbf16, #tpu.memory_space<vmem>>, vector<128x128xbf16>,
    } else {
    }
    return
  }
  func.func @transform_0(%arg0: i32, %arg1: i32) -> (i32, i32) {
    %c0_i32 = arith.constant 0 : i32
    return %arg0, %arg1 : i32, i32
  }
  func.func @transform_1(%arg0: i32, %arg1: i32) -> (i32, i32) {
    %c0_i32 = arith.constant 0 : i32
    %c0_i32_0 = arith.constant 0 : i32
    return %arg1, %c0_i32 : i32, i32
  }
  func.func @transform_2(%arg0: i32, %arg1: i32) -> (i32, i32) {
    %c0_i32 = arith.constant 0 : i32
    %c0_i32_0 = arith.constant 0 : i32
    return %arg0, %c0_i32 : i32, i32
  }
  func.func @transform_3(%arg0: i32, %arg1: i32) -> (i32, i32) {
    %c0_i32 = arith.constant 0 : i32
    %c0_i32_0 = arith.constant 0 : i32
    %c0_i32_1 = arith.constant 0 : i32
    return %c0_i32, %c0_i32_0 : i32, i32
  }
  func.func @transform_4(%arg0: i32, %arg1: i32) -> (i32, i32) {
    %c0_i32 = arith.constant 0 : i32
    %c0_i32_0 = arith.constant 0 : i32
    %c0_i32_1 = arith.constant 0 : i32
    return %c0_i32, %c0_i32_0 : i32, i32
  }
  func.func @transform_5(%arg0: i32, %arg1: i32) -> (i32, i32) {
    %c0_i32 = arith.constant 0 : i32
    %c0_i32_0 = arith.constant 0 : i32
    return %arg0, %c0_i32 : i32, i32
  }
}

</mosaic_0001>

<llo_original>
// kernel: sage_forward.5
$region0: #{sage_forward.5}
  #allocation0 [shape = 'u32[]', space=smem, size = 0x4, offset = 0x4, fixed_abs, tag = 'smem constant byte address 0x4 - core index']
  #allocation1 [shape = 'u32[144,128]{1,0:T(1,128)}', space=vmem, size = 0x12000, scoped, tag = 'internal scratch']
  #allocation2 [shape = 'f32[8,128]{1,0:T(8,128)}', space=vmem, size = 0x1000, scoped, tag = 'scratch operand']
  %s0 = inlined_call_operand.vmem [shape: bf16[8,128], index: 0, kind: input, shape index: {}]
  %s1 = inlined_call_operand.vmem [shape: bf16[128,128], index: 1, kind: input, shape index: {}]
  %s2 = inlined_call_operand.vmem [shape: bf16[128,128], index: 2, kind: input, shape index: {}]
  %s3 = inlined_call_operand.vmem [shape: f32[1,128], index: 3, kind: input, shape index: {}]
  %s4 = inlined_call_operand.vmem [shape: f32[8,128], index: 4, kind: output, shape index: {}]
  %s5 = sld [smem:[#allocation0]]
  $region34: #{sage_forward.5} parent=0
    _
  %s7 = ssub.s32 1, %s5
  %s8 = scalar_select 0, %s7, %s5
  // Predicated region
  $region2: #{sage_forward.5} parent=0 // pred_check
    _
  $region3: #{sage_forward.5} parent=0 // pred_check_branch
    %10 = sbr.rel (0) target = $region5
  $region4: #{sage_forward.5} parent=0 // pred_region
    _
  $region5: #{sage_forward.5} parent=0 // pred_fallthru
    _
  // Predicated region
  $region6: #{sage_forward.5} parent=0 // pred_check
    _
  $region7: #{sage_forward.5} parent=0 // pred_check_branch
    %12 = sbr.rel (0) target = $region9
  $region8: #{sage_forward.5} parent=0 // pred_region
    _
  $region9: #{sage_forward.5} parent=0 // pred_fallthru
    _
  // Predicated region
  $region10: #{sage_forward.5} parent=0 // pred_check
    _
  $region11: #{sage_forward.5} parent=0 // pred_check_branch
    %14 = sbr.rel (0) target = $region13
  $region12: #{sage_forward.5} parent=0 // pred_region
    _
  $region13: #{sage_forward.5} parent=0 // pred_fallthru
    _
  // Predicated region
  $region14: #{sage_forward.5} parent=0 // pred_check
    _
  $region15: #{sage_forward.5} parent=0 // pred_check_branch
    %16 = sbr.rel (0) target = $region17
  $region16: #{sage_forward.5} parent=0 // pred_region
    _
  $region17: #{sage_forward.5} parent=0 // pred_fallthru
    _
  %p18 = scmp.eq.s32.totalorder 0, 0
  // Predicated region
  $region18: #{sage_forward.5} parent=0 // pred_check
    %p19 = pneg %p18
  $region19: #{sage_forward.5} parent=0 // pred_check_branch
    %21 = sbr.rel (%p19) target = $region21
  $region20: #{sage_forward.5} parent=0 // pred_region
    %22 = vst [vmem:[#allocation2] sm:$0xff] 0.0
  $region21: #{sage_forward.5} parent=0 // pred_fallthru
    _
  %v23 = vld [vmem:[#allocation2] sm:$0xff]
  %v24 = vld [vmem:[%s0] sm:$0xf]
  %v25 = vld [vmem:[%s1] sm:$0xf]
  %v26 = vld [vmem:[%s1 + $0x4] sm:$0xf]
  %v27 = vld [vmem:[%s1 + $0x8] sm:$0xf]
  %v28 = vld [vmem:[%s1 + $0xc] sm:$0xf]
  %v29 = vld [vmem:[%s1 + $0x10] sm:$0xf]
  %v30 = vld [vmem:[%s1 + $0x14] sm:$0xf]
  %v31 = vld [vmem:[%s1 + $0x18] sm:$0xf]
  %v32 = vld [vmem:[%s1 + $0x1c] sm:$0xf]
  %v33 = vld [vmem:[%s1 + $0x20] sm:$0xf]
  %v34 = vld [vmem:[%s1 + $0x24] sm:$0xf]
  %v35 = vld [vmem:[%s1 + $0x28] sm:$0xf]
  %v36 = vld [vmem:[%s1 + $0x2c] sm:$0xf]
  %v37 = vld [vmem:[%s1 + $0x30] sm:$0xf]
  %v38 = vld [vmem:[%s1 + $0x34] sm:$0xf]
  %v39 = vld [vmem:[%s1 + $0x38] sm:$0xf]
  %v40 = vld [vmem:[%s1 + $0x3c] sm:$0xf]
  %v57 = vunpack.c.l.b16 %v25
  %v58 = vunpack.c.l.b16 %v26
  %v59 = vunpack.c.l.b16 %v27
  %v60 = vunpack.c.l.b16 %v28
  %v61 = vunpack.c.l.b16 %v29
  %v62 = vunpack.c.l.b16 %v30
  %v63 = vunpack.c.l.b16 %v31
  %v64 = vunpack.c.l.b16 %v32
  %v65 = vunpack.c.l.b16 %v33
  %v66 = vunpack.c.l.b16 %v34
  %v67 = vunpack.c.l.b16 %v35
  %v68 = vunpack.c.l.b16 %v36
  %v69 = vunpack.c.l.b16 %v37
  %v70 = vunpack.c.l.b16 %v38
  %v71 = vunpack.c.l.b16 %v39
  %v72 = vunpack.c.l.b16 %v40
  %v73 = vpack.c.b16 %v58, %v57
  %v74 = vpack.c.b16 %v60, %v59
  %v75 = vpack.c.b16 %v62, %v61
  %v76 = vpack.c.b16 %v64, %v63
  %v77 = vpack.c.b16 %v66, %v65
  %v78 = vpack.c.b16 %v68, %v67
  %v79 = vpack.c.b16 %v70, %v69
  %v80 = vpack.c.b16 %v72, %v71
  %89 = vmatprep.subr.bf16.mxu0 0
  %90 = vmatpush1.bf16.msra.mxu0 %v80
  %91 = vmatprep.subr.bf16.mxu0 0
  %92 = vmatpush1.bf16.msra.mxu0 %v79
  %93 = vmatprep.subr.bf16.mxu0 0
  %94 = vmatpush1.bf16.msra.mxu0 %v78
  %95 = vmatprep.subr.bf16.mxu0 0
  %96 = vmatpush1.bf16.msra.mxu0 %v77
  %97 = vmatprep.subr.bf16.mxu0 0
  %98 = vmatpush1.bf16.msra.mxu0 %v76
  %99 = vmatprep.subr.bf16.mxu0 0
  %100 = vmatpush1.bf16.msra.mxu0 %v75
  %101 = vmatprep.subr.bf16.mxu0 0
  %102 = vmatpush1.bf16.msra.mxu0 %v74
  %103 = vmatprep.subr.bf16.mxu0 0
  %104 = vmatpush1.bf16.msra.mxu0 %v73
  %105 = vmatprep.subr.bf16.mxu0 0
  %106 = vmatpush2.bf16.msra.mxu0 0
  %107 = vmatprep.subr.bf16.mxu0 0
  %108 = vmatpush2.bf16.msra.mxu0 0
  %109 = vmatprep.subr.bf16.mxu0 0
  %110 = vmatpush2.bf16.msra.mxu0 0
  %111 = vmatprep.subr.bf16.mxu0 0
  %112 = vmatpush2.bf16.msra.mxu0 0
  %113 = vmatprep.subr.bf16.mxu0 0
  %114 = vmatpush2.bf16.msra.mxu0 0
  %115 = vmatprep.subr.bf16.mxu0 0
  %116 = vmatpush2.bf16.msra.mxu0 0
  %117 = vmatprep.subr.bf16.mxu0 0
  %118 = vmatpush2.bf16.msra.mxu0 0
  %119 = vmatprep.subr.bf16.mxu0 0
  %120 = vmatpush2.bf16.msra.mxu0 0
  %121 = vmatprep.mubr.bf16.mxu0 0
  %122 = vmatmul.mubr.bf16.gmra.mxu0 %v24
  %v123 = vpop.f32.mrf.mxu0
  %v124 = vadd.f32 0.0, %v123
  %v125 = vpop.f32.mrf.mxu0
  %v126 = vpop.f32.mrf.mxu0
  %v127 = vpop.f32.mrf.mxu0
  %128 = vdwg.mxu0
  %v129 = vadd.f32 %v23, %v124
  %130 = vst [vmem:[#allocation2] sm:$0xff] %v129
  // Predicated region
  $region22: #{sage_forward.5} parent=0 // pred_check
    %p131 = pneg %p18
  $region23: #{sage_forward.5} parent=0 // pred_check_branch
    %133 = sbr.rel (%p131) target = $region25
  $region24: #{sage_forward.5} parent=0 // pred_region
    %v134 = vld [vmem:[#allocation2] sm:$0xff]
    %v135 = vpack.c.bf16 %v134, %v134
    %v136 = vld [vmem:[%s2] sm:$0xf]
    %v137 = vld [vmem:[%s2 + $0x4] sm:$0xf]
    %v138 = vld [vmem:[%s2 + $0x8] sm:$0xf]
    %v139 = vld [vmem:[%s2 + $0xc] sm:$0xf]
    %v140 = vld [vmem:[%s2 + $0x10] sm:$0xf]
    %v141 = vld [vmem:[%s2 + $0x14] sm:$0xf]
    %v142 = vld [vmem:[%s2 + $0x18] sm:$0xf]
    %v143 = vld [vmem:[%s2 + $0x1c] sm:$0xf]
    %v144 = vld [vmem:[%s2 + $0x20] sm:$0xf]
    %v145 = vld [vmem:[%s2 + $0x24] sm:$0xf]
    %v146 = vld [vmem:[%s2 + $0x28] sm:$0xf]
    %v147 = vld [vmem:[%s2 + $0x2c] sm:$0xf]
    %v148 = vld [vmem:[%s2 + $0x30] sm:$0xf]
    %v149 = vld [vmem:[%s2 + $0x34] sm:$0xf]
    %v150 = vld [vmem:[%s2 + $0x38] sm:$0xf]
    %v151 = vld [vmem:[%s2 + $0x3c] sm:$0xf]
    %v152 = vld [vmem:[%s3] sm:$0x1]
    %v154 = vlaneseq
    %v155 = vshrl.u32 %v154, 7
    %v156 = vsub.s32 0, %v155
    %v157 = vrot.slane %v152, %v156
    %v175 = vunpack.c.l.b16 %v136
    %v176 = vunpack.c.l.b16 %v137
    %v177 = vunpack.c.l.b16 %v138
    %v178 = vunpack.c.l.b16 %v139
    %v179 = vunpack.c.l.b16 %v140
    %v180 = vunpack.c.l.b16 %v141
    %v181 = vunpack.c.l.b16 %v142
    %v182 = vunpack.c.l.b16 %v143
    %v183 = vunpack.c.l.b16 %v144
    %v184 = vunpack.c.l.b16 %v145
    %v185 = vunpack.c.l.b16 %v146
    %v186 = vunpack.c.l.b16 %v147
    %v187 = vunpack.c.l.b16 %v148
    %v188 = vunpack.c.l.b16 %v149
    %v189 = vunpack.c.l.b16 %v150
    %v190 = vunpack.c.l.b16 %v151
    %v191 = vpack.c.b16 %v176, %v175
    %v192 = vpack.c.b16 %v178, %v177
    %v193 = vpack.c.b16 %v180, %v179
    %v194 = vpack.c.b16 %v182, %v181
    %v195 = vpack.c.b16 %v184, %v183
    %v196 = vpack.c.b16 %v186, %v185
    %v197 = vpack.c.b16 %v188, %v187
    %v198 = vpack.c.b16 %v190, %v189
    %207 = vmatprep.subr.bf16.mxu0 0
    %208 = vmatpush1.bf16.msra.mxu0 %v198
    %209 = vmatprep.subr.bf16.mxu0 0
    %210 = vmatpush1.bf16.msra.mxu0 %v197
    %211 = vmatprep.subr.bf16.mxu0 0
    %212 = vmatpush1.bf16.msra.mxu0 %v196
    %213 = vmatprep.subr.bf16.mxu0 0
    %214 = vmatpush1.bf16.msra.mxu0 %v195
    %215 = vmatprep.subr.bf16.mxu0 0
    %216 = vmatpush1.bf16.msra.mxu0 %v194
    %217 = vmatprep.subr.bf16.mxu0 0
    %218 = vmatpush1.bf16.msra.mxu0 %v193
    %219 = vmatprep.subr.bf16.mxu0 0
    %220 = vmatpush1.bf16.msra.mxu0 %v192
    %221 = vmatprep.subr.bf16.mxu0 0
    %222 = vmatpush1.bf16.msra.mxu0 %v191
    %223 = vmatprep.subr.bf16.mxu0 0
    %224 = vmatpush2.bf16.msra.mxu0 0
    %225 = vmatprep.subr.bf16.mxu0 0
    %226 = vmatpush2.bf16.msra.mxu0 0
    %227 = vmatprep.subr.bf16.mxu0 0
    %228 = vmatpush2.bf16.msra.mxu0 0
    %229 = vmatprep.subr.bf16.mxu0 0
    %230 = vmatpush2.bf16.msra.mxu0 0
    %231 = vmatprep.subr.bf16.mxu0 0
    %232 = vmatpush2.bf16.msra.mxu0 0
    %233 = vmatprep.subr.bf16.mxu0 0
    %234 = vmatpush2.bf16.msra.mxu0 0
    %235 = vmatprep.subr.bf16.mxu0 0
    %236 = vmatpush2.bf16.msra.mxu0 0
    %237 = vmatprep.subr.bf16.mxu0 0
    %238 = vmatpush2.bf16.msra.mxu0 0
    %239 = vmatprep.mubr.bf16.mxu0 0
    %240 = vmatmul.mubr.bf16.gmra.mxu0 %v135
    %v241 = vpop.f32.mrf.mxu0
    %v242 = vadd.f32 %v157, %v241
    %v243 = vpop.f32.mrf.mxu0
    %v244 = vpop.f32.mrf.mxu0
    %v245 = vpop.f32.mrf.mxu0
    %246 = vdwg.mxu0
    %247 = vst [vmem:[%s4] sm:$0xff] %v242
  $region25: #{sage_forward.5} parent=0 // pred_fallthru
    _
  // Predicated region
  $region26: #{sage_forward.5} parent=0 // pred_check
    _
  $region27: #{sage_forward.5} parent=0 // pred_check_branch
    %249 = sbr.rel (0) target = $region29
  $region28: #{sage_forward.5} parent=0 // pred_region
    _
  $region29: #{sage_forward.5} parent=0 // pred_fallthru
    _
  // Predicated region
  $region30: #{sage_forward.5} parent=0 // pred_check
    _
  $region31: #{sage_forward.5} parent=0 // pred_check_branch
    %251 = sbr.rel (0) target = $region33
  $region32: #{sage_forward.5} parent=0 // pred_region
    _
  $region33: #{sage_forward.5} parent=0 // pred_fallthru
    _

// kernel: sage_forward.3
$region0: #{sage_forward.3}
  #allocation0 [shape = 'u32[]', space=smem, size = 0x4, offset = 0x4, fixed_abs, tag = 'smem constant byte address 0x4 - core index']
  #allocation1 [shape = 'u32[144,128]{1,0:T(1,128)}', space=vmem, size = 0x12000, scoped, tag = 'internal scratch']
  #allocation2 [shape = 'f32[128,128]{1,0:T(8,128)}', space=vmem, size = 0x10000, scoped, tag = 'scratch operand']
  %s0 = inlined_call_operand.vmem [shape: bf16[128,128], index: 0, kind: input, shape index: {}]
  %s1 = inlined_call_operand.vmem [shape: bf16[128,128], index: 1, kind: input, shape index: {}, may-alias: {1,2}]
  %s2 = inlined_call_operand.vmem [shape: bf16[128,128], index: 2, kind: input, shape index: {}, may-alias: {1,2}]
  %s3 = inlined_call_operand.vmem [shape: bf16[256,128], index: 3, kind: input, shape index: {}]
  %s4 = inlined_call_operand.vmem [shape: f32[1,128], index: 4, kind: input, shape index: {}]
  %s5 = inlined_call_operand.vmem [shape: bf16[128,128], index: 5, kind: output, shape index: {}]
  %s6 = sld [smem:[#allocation0]]
  $region38: #{sage_forward.3} parent=0
    _
  %s8 = ssub.s32 1, %s6
  %s9 = scalar_select 0, %s8, %s6
  // Predicated region
  $region2: #{sage_forward.3} parent=0 // pred_check
    _
  $region3: #{sage_forward.3} parent=0 // pred_check_branch
    %11 = sbr.rel (0) target = $region5
  $region4: #{sage_forward.3} parent=0 // pred_region
    _
  $region5: #{sage_forward.3} parent=0 // pred_fallthru
    _
  // Predicated region
  $region6: #{sage_forward.3} parent=0 // pred_check
    _
  $region7: #{sage_forward.3} parent=0 // pred_check_branch
    %13 = sbr.rel (0) target = $region9
  $region8: #{sage_forward.3} parent=0 // pred_region
    _
  $region9: #{sage_forward.3} parent=0 // pred_fallthru
    _
  // Predicated region
  $region10: #{sage_forward.3} parent=0 // pred_check
    _
  $region11: #{sage_forward.3} parent=0 // pred_check_branch
    %15 = sbr.rel (0) target = $region13
  $region12: #{sage_forward.3} parent=0 // pred_region
    _
  $region13: #{sage_forward.3} parent=0 // pred_fallthru
    _
  // Predicated region
  $region14: #{sage_forward.3} parent=0 // pred_check
    _
  $region15: #{sage_forward.3} parent=0 // pred_check_branch
    %17 = sbr.rel (0) target = $region17
  $region16: #{sage_forward.3} parent=0 // pred_region
    _
  $region17: #{sage_forward.3} parent=0 // pred_fallthru
    _
  // Predicated region
  $region18: #{sage_forward.3} parent=0 // pred_check
    _
  $region19: #{sage_forward.3} parent=0 // pred_check_branch
    %19 = sbr.rel (0) target = $region21
  $region20: #{sage_forward.3} parent=0 // pred_region
    _
  $region21: #{sage_forward.3} parent=0 // pred_fallthru
    _
  %p21 = scmp.eq.s32.totalorder 0, 0
  // Predicated region
  $region22: #{sage_forward.3} parent=0 // pred_check
    %p22 = pneg %p21
  $region23: #{sage_forward.3} parent=0 // pred_check_branch
    %24 = sbr.rel (%p22) target = $region25
  $region24: #{sage_forward.3} parent=0 // pred_region
    %25 = vst [vmem:[#allocation2] sm:$0xff] 0.0
    %26 = vst [vmem:[#allocation2 + $0x8] sm:$0xff] 0.0
    %27 = vst [vmem:[#allocation2 + $0x10] sm:$0xff] 0.0
    %28 = vst [vmem:[#allocation2 + $0x18] sm:$0xff] 0.0
    %29 = vst [vmem:[#allocation2 + $0x20] sm:$0xff] 0.0
    %30 = vst [vmem:[#allocation2 + $0x28] sm:$0xff] 0.0
    %31 = vst [vmem:[#allocation2 + $0x30] sm:$0xff] 0.0
    %32 = vst [vmem:[#allocation2 + $0x38] sm:$0xff] 0.0
    %33 = vst [vmem:[#allocation2 + $0x40] sm:$0xff] 0.0
    %34 = vst [vmem:[#allocation2 + $0x48] sm:$0xff] 0.0
    %35 = vst [vmem:[#allocation2 + $0x50] sm:$0xff] 0.0
    %36 = vst [vmem:[#allocation2 + $0x58] sm:$0xff] 0.0
    %37 = vst [vmem:[#allocation2 + $0x60] sm:$0xff] 0.0
    %38 = vst [vmem:[#allocation2 + $0x68] sm:$0xff] 0.0
    %39 = vst [vmem:[#allocation2 + $0x70] sm:$0xff] 0.0
    %40 = vst [vmem:[#allocation2 + $0x78] sm:$0xff] 0.0
  $region25: #{sage_forward.3} parent=0 // pred_fallthru
    _
  %v41 = vld [vmem:[#allocation2] sm:$0xff]
  %v42 = vld [vmem:[#allocation2 + $0x8] sm:$0xff]
  %v43 = vld [vmem:[#allocation2 + $0x10] sm:$0xff]
  %v44 = vld [vmem:[#allocation2 + $0x18] sm:$0xff]
  %v45 = vld [vmem:[#allocation2 + $0x20] sm:$0xff]
  %v46 = vld [vmem:[#allocation2 + $0x28] sm:$0xff]
  %v47 = vld [vmem:[#allocation2 + $0x30] sm:$0xff]
  %v48 = vld [vmem:[#allocation2 + $0x38] sm:$0xff]
  %v49 = vld [vmem:[#allocation2 + $0x40] sm:$0xff]
  %v50 = vld [vmem:[#allocation2 + $0x48] sm:$0xff]
  %v51 = vld [vmem:[#allocation2 + $0x50] sm:$0xff]
  %v52 = vld [vmem:[#allocation2 + $0x58] sm:$0xff]
  %v53 = vld [vmem:[#allocation2 + $0x60] sm:$0xff]
  %v54 = vld [vmem:[#allocation2 + $0x68] sm:$0xff]
  %v55 = vld [vmem:[#allocation2 + $0x70] sm:$0xff]
  %v56 = vld [vmem:[#allocation2 + $0x78] sm:$0xff]
  %v57 = vld [vmem:[%s0] sm:$0xf]
  %v58 = vld [vmem:[%s0 + $0x4] sm:$0xf]
  %v59 = vld [vmem:[%s0 + $0x8] sm:$0xf]
  %v60 = vld [vmem:[%s0 + $0xc] sm:$0xf]
  %v61 = vld [vmem:[%s0 + $0x10] sm:$0xf]
  %v62 = vld [vmem:[%s0 + $0x14] sm:$0xf]
  %v63 = vld [vmem:[%s0 + $0x18] sm:$0xf]
  %v64 = vld [vmem:[%s0 + $0x1c] sm:$0xf]
  %v65 = vld [vmem:[%s0 + $0x20] sm:$0xf]
  %v66 = vld [vmem:[%s0 + $0x24] sm:$0xf]
  %v67 = vld [vmem:[%s0 + $0x28] sm:$0xf]
  %v68 = vld [vmem:[%s0 + $0x2c] sm:$0xf]
  %v69 = vld [vmem:[%s0 + $0x30] sm:$0xf]
  %v70 = vld [vmem:[%s0 + $0x34] sm:$0xf]
  %v71 = vld [vmem:[%s0 + $0x38] sm:$0xf]
  %v72 = vld [vmem:[%s0 + $0x3c] sm:$0xf]
  %v73 = vld [vmem:[%s1] sm:$0xf]
  %v74 = vld [vmem:[%s1 + $0x4] sm:$0xf]
  %v75 = vld [vmem:[%s1 + $0x8] sm:$0xf]
  %v76 = vld [vmem:[%s1 + $0xc] sm:$0xf]
  %v77 = vld [vmem:[%s1 + $0x10] sm:$0xf]
  %v78 = vld [vmem:[%s1 + $0x14] sm:$0xf]
  %v79 = vld [vmem:[%s1 + $0x18] sm:$0xf]
  %v80 = vld [vmem:[%s1 + $0x1c] sm:$0xf]
  %v81 = vld [vmem:[%s1 + $0x20] sm:$0xf]
  %v82 = vld [vmem:[%s1 + $0x24] sm:$0xf]
  %v83 = vld [vmem:[%s1 + $0x28] sm:$0xf]
  %v84 = vld [vmem:[%s1 + $0x2c] sm:$0xf]
  %v85 = vld [vmem:[%s1 + $0x30] sm:$0xf]
  %v86 = vld [vmem:[%s1 + $0x34] sm:$0xf]
  %v87 = vld [vmem:[%s1 + $0x38] sm:$0xf]
  %v88 = vld [vmem:[%s1 + $0x3c] sm:$0xf]
  %v105 = vunpack.c.l.b16 %v57
  %v106 = vunpack.c.l.b16 %v58
  %v107 = vunpack.c.l.b16 %v59
  %v108 = vunpack.c.l.b16 %v60
  %v109 = vunpack.c.l.b16 %v61
  %v110 = vunpack.c.l.b16 %v62
  %v111 = vunpack.c.l.b16 %v63
  %v112 = vunpack.c.l.b16 %v64
  %v113 = vunpack.c.l.b16 %v65
  %v114 = vunpack.c.l.b16 %v66
  %v115 = vunpack.c.l.b16 %v67
  %v116 = vunpack.c.l.b16 %v68
  %v117 = vunpack.c.l.b16 %v69
  %v118 = vunpack.c.l.b16 %v70
  %v119 = vunpack.c.l.b16 %v71
  %v120 = vunpack.c.l.b16 %v72
  %v121 = vpack.c.b16 %v106, %v105
  %v122 = vpack.c.b16 %v108, %v107
  %v123 = vpack.c.b16 %v110, %v109
  %v124 = vpack.c.b16 %v112, %v111
  %v125 = vpack.c.b16 %v114, %v113
  %v126 = vpack.c.b16 %v116, %v115
  %v127 = vpack.c.b16 %v118, %v117
  %v128 = vpack.c.b16 %v120, %v119
  %v153 = vunpack.c.l.b16 %v73
  %v154 = vunpack.c.l.b16 %v74
  %v155 = vunpack.c.l.b16 %v75
  %v156 = vunpack.c.l.b16 %v76
  %v157 = vunpack.c.l.b16 %v77
  %v158 = vunpack.c.l.b16 %v78
  %v159 = vunpack.c.l.b16 %v79
  %v160 = vunpack.c.l.b16 %v80
  %v161 = vunpack.c.l.b16 %v81
  %v162 = vunpack.c.l.b16 %v82
  %v163 = vunpack.c.l.b16 %v83
  %v164 = vunpack.c.l.b16 %v84
  %v165 = vunpack.c.l.b16 %v85
  %v166 = vunpack.c.l.b16 %v86
  %v167 = vunpack.c.l.b16 %v87
  %v168 = vunpack.c.l.b16 %v88
  %v169 = vpack.c.b16 %v154, %v153
  %v170 = vpack.c.b16 %v156, %v155
  %v171 = vpack.c.b16 %v158, %v157
  %v172 = vpack.c.b16 %v160, %v159
  %v173 = vpack.c.b16 %v162, %v161
  %v174 = vpack.c.b16 %v164, %v163
  %v175 = vpack.c.b16 %v166, %v165
  %v176 = vpack.c.b16 %v168, %v167
  %185 = vmatprep.subr.bf16.mxu0 0
  %186 = vmatpush1.bf16.msra.mxu0 %v176
  %187 = vmatprep.subr.bf16.mxu0 0
  %188 = vmatpush1.bf16.msra.mxu0 %v175
  %189 = vmatprep.subr.bf16.mxu0 0
  %190 = vmatpush1.bf16.msra.mxu0 %v174
  %191 = vmatprep.subr.bf16.mxu0 0
  %192 = vmatpush1.bf16.msra.mxu0 %v173
  %193 = vmatprep.subr.bf16.mxu0 0
  %194 = vmatpush1.bf16.msra.mxu0 %v172
  %195 = vmatprep.subr.bf16.mxu0 0
  %196 = vmatpush1.bf16.msra.mxu0 %v171
  %197 = vmatprep.subr.bf16.mxu0 0
  %198 = vmatpush1.bf16.msra.mxu0 %v170
  %199 = vmatprep.subr.bf16.mxu0 0
  %200 = vmatpush1.bf16.msra.mxu0 %v169
  %201 = vmatprep.subr.bf16.mxu0 0
  %202 = vmatpush2.bf16.msra.mxu0 0
  %203 = vmatprep.subr.bf16.mxu0 0
  %204 = vmatpush2.bf16.msra.mxu0 0
  %205 = vmatprep.subr.bf16.mxu0 0
  %206 = vmatpush2.bf16.msra.mxu0 0
  %207 = vmatprep.subr.bf16.mxu0 0
  %208 = vmatpush2.bf16.msra.mxu0 0
  %209 = vmatprep.subr.bf16.mxu0 0
  %210 = vmatpush2.bf16.msra.mxu0 0
  %211 = vmatprep.subr.bf16.mxu0 0
  %212 = vmatpush2.bf16.msra.mxu0 0
  %213 = vmatprep.subr.bf16.mxu0 0
  %214 = vmatpush2.bf16.msra.mxu0 0
  %215 = vmatprep.subr.bf16.mxu0 0
  %216 = vmatpush2.bf16.msra.mxu0 0
  %217 = vmatprep.mubr.bf16.mxu0 0
  %218 = vmatmul.mubr.bf16.gmra.mxu0 %v121
  %v219 = vpop.f32.mrf.mxu0
  %v220 = vadd.f32 0.0, %v219
  %v221 = vpop.f32.mrf.mxu0
  %v222 = vpop.f32.mrf.mxu0
  %v223 = vadd.f32 0.0, %v222
  %v224 = vpop.f32.mrf.mxu0
  %225 = vmatprep.mubr.bf16.mxu0 0
  %226 = vmatmul.mubr.bf16.gmra.mxu0 %v122
  %v227 = vpop.f32.mrf.mxu0
  %v228 = vadd.f32 0.0, %v227
  %v229 = vpop.f32.mrf.mxu0
  %v230 = vpop.f32.mrf.mxu0
  %v231 = vadd.f32 0.0, %v230
  %v232 = vpop.f32.mrf.mxu0
  %233 = vmatprep.mubr.bf16.mxu0 0
  %234 = vmatmul.mubr.bf16.gmra.mxu0 %v123
  %v235 = vpop.f32.mrf.mxu0
  %v236 = vadd.f32 0.0, %v235
  %v237 = vpop.f32.mrf.mxu0
  %v238 = vpop.f32.mrf.mxu0
  %v239 = vadd.f32 0.0, %v238
  %v240 = vpop.f32.mrf.mxu0
  %241 = vmatprep.mubr.bf16.mxu0 0
  %242 = vmatmul.mubr.bf16.gmra.mxu0 %v124
  %v243 = vpop.f32.mrf.mxu0
  %v244 = vadd.f32 0.0, %v243
  %v245 = vpop.f32.mrf.mxu0
  %v246 = vpop.f32.mrf.mxu0
  %v247 = vadd.f32 0.0, %v246
  %v248 = vpop.f32.mrf.mxu0
  %249 = vmatprep.mubr.bf16.mxu0 0
  %250 = vmatmul.mubr.bf16.gmra.mxu0 %v125
  %v251 = vpop.f32.mrf.mxu0
  %v252 = vadd.f32 0.0, %v251
  %v253 = vpop.f32.mrf.mxu0
  %v254 = vpop.f32.mrf.mxu0
  %v255 = vadd.f32 0.0, %v254
  %v256 = vpop.f32.mrf.mxu0
  %257 = vmatprep.mubr.bf16.mxu0 0
  %258 = vmatmul.mubr.bf16.gmra.mxu0 %v126
  %v259 = vpop.f32.mrf.mxu0
  %v260 = vadd.f32 0.0, %v259
  %v261 = vpop.f32.mrf.mxu0
  %v262 = vpop.f32.mrf.mxu0
  %v263 = vadd.f32 0.0, %v262
  %v264 = vpop.f32.mrf.mxu0
  %265 = vmatprep.mubr.bf16.mxu0 0
  %266 = vmatmul.mubr.bf16.gmra.mxu0 %v127
  %v267 = vpop.f32.mrf.mxu0
  %v268 = vadd.f32 0.0, %v267
  %v269 = vpop.f32.mrf.mxu0
  %v270 = vpop.f32.mrf.mxu0
  %v271 = vadd.f32 0.0, %v270
  %v272 = vpop.f32.mrf.mxu0
  %273 = vmatprep.mubr.bf16.mxu0 0
  %274 = vmatmul.mubr.bf16.gmra.mxu0 %v128
  %v275 = vpop.f32.mrf.mxu0
  %v276 = vadd.f32 0.0, %v275
  %v277 = vpop.f32.mrf.mxu0
  %v278 = vpop.f32.mrf.mxu0
  %v279 = vadd.f32 0.0, %v278
  %v280 = vpop.f32.mrf.mxu0
  %281 = vdwg.mxu0
  %v282 = vadd.f32 %v41, %v220
  %v283 = vadd.f32 %v42, %v223
  %v284 = vadd.f32 %v43, %v228
  %v285 = vadd.f32 %v44, %v231
  %v286 = vadd.f32 %v45, %v236
  %v287 = vadd.f32 %v46, %v239
  %v288 = vadd.f32 %v47, %v244
  %v289 = vadd.f32 %v48, %v247
  %v290 = vadd.f32 %v49, %v252
  %v291 = vadd.f32 %v50, %v255
  %v292 = vadd.f32 %v51, %v260
  %v293 = vadd.f32 %v52, %v263
  %v294 = vadd.f32 %v53, %v268
  %v295 = vadd.f32 %v54, %v271
  %v296 = vadd.f32 %v55, %v276
  %v297 = vadd.f32 %v56, %v279
  %298 = vst [vmem:[#allocation2] sm:$0xff] %v282
  %299 = vst [vmem:[#allocation2 + $0x8] sm:$0xff] %v283
  %300 = vst [vmem:[#allocation2 + $0x10] sm:$0xff] %v284
  %301 = vst [vmem:[#allocation2 + $0x18] sm:$0xff] %v285
  %302 = vst [vmem:[#allocation2 + $0x20] sm:$0xff] %v286
  %303 = vst [vmem:[#allocation2 + $0x28] sm:$0xff] %v287
  %304 = vst [vmem:[#allocation2 + $0x30] sm:$0xff] %v288
  %305 = vst [vmem:[#allocation2 + $0x38] sm:$0xff] %v289
  %306 = vst [vmem:[#allocation2 + $0x40] sm:$0xff] %v290
  %307 = vst [vmem:[#allocation2 + $0x48] sm:$0xff] %v291
  %308 = vst [vmem:[#allocation2 + $0x50] sm:$0xff] %v292
  %309 = vst [vmem:[#allocation2 + $0x58] sm:$0xff] %v293
  %310 = vst [vmem:[#allocation2 + $0x60] sm:$0xff] %v294
  %311 = vst [vmem:[#allocation2 + $0x68] sm:$0xff] %v295
  %312 = vst [vmem:[#allocation2 + $0x70] sm:$0xff] %v296
  %313 = vst [vmem:[#allocation2 + $0x78] sm:$0xff] %v297
  // Predicated region
  $region26: #{sage_forward.3} parent=0 // pred_check
    %p314 = pneg %p21
  $region27: #{sage_forward.3} parent=0 // pred_check_branch
    %316 = sbr.rel (%p314) target = $region29
  $region28: #{sage_forward.3} parent=0 // pred_region
    %v317 = vld [vmem:[#allocation2] sm:$0xff]
    %v318 = vld [vmem:[#allocation2 + $0x8] sm:$0xff]
    %v319 = vld [vmem:[#allocation2 + $0x10] sm:$0xff]
    %v320 = vld [vmem:[#allocation2 + $0x18] sm:$0xff]
    %v321 = vld [vmem:[#allocation2 + $0x20] sm:$0xff]
    %v322 = vld [vmem:[#allocation2 + $0x28] sm:$0xff]
    %v323 = vld [vmem:[#allocation2 + $0x30] sm:$0xff]
    %v324 = vld [vmem:[#allocation2 + $0x38] sm:$0xff]
    %v325 = vld [vmem:[#allocation2 + $0x40] sm:$0xff]
    %v326 = vld [vmem:[#allocation2 + $0x48] sm:$0xff]
    %v327 = vld [vmem:[#allocation2 + $0x50] sm:$0xff]
    %v328 = vld [vmem:[#allocation2 + $0x58] sm:$0xff]
    %v329 = vld [vmem:[#allocation2 + $0x60] sm:$0xff]
    %v330 = vld [vmem:[#allocation2 + $0x68] sm:$0xff]
    %v331 = vld [vmem:[#allocation2 + $0x70] sm:$0xff]
    %v332 = vld [vmem:[#allocation2 + $0x78] sm:$0xff]
    %v333 = vpack.c.bf16 %v318, %v317
    %v334 = vpack.c.bf16 %v320, %v319
    %v335 = vpack.c.bf16 %v322, %v321
    %v336 = vpack.c.bf16 %v324, %v323
    %v337 = vpack.c.bf16 %v326, %v325
    %v338 = vpack.c.bf16 %v328, %v327
    %v339 = vpack.c.bf16 %v330, %v329
    %v340 = vpack.c.bf16 %v332, %v331
    %v341 = vld [vmem:[%s2] sm:$0xf]
    %v342 = vld [vmem:[%s2 + $0x4] sm:$0xf]
    %v343 = vld [vmem:[%s2 + $0x8] sm:$0xf]
    %v344 = vld [vmem:[%s2 + $0xc] sm:$0xf]
    %v345 = vld [vmem:[%s2 + $0x10] sm:$0xf]
    %v346 = vld [vmem:[%s2 + $0x14] sm:$0xf]
    %v347 = vld [vmem:[%s2 + $0x18] sm:$0xf]
    %v348 = vld [vmem:[%s2 + $0x1c] sm:$0xf]
    %v349 = vld [vmem:[%s2 + $0x20] sm:$0xf]
    %v350 = vld [vmem:[%s2 + $0x24] sm:$0xf]
    %v351 = vld [vmem:[%s2 + $0x28] sm:$0xf]
    %v352 = vld [vmem:[%s2 + $0x2c] sm:$0xf]
    %v353 = vld [vmem:[%s2 + $0x30] sm:$0xf]
    %v354 = vld [vmem:[%s2 + $0x34] sm:$0xf]
    %v355 = vld [vmem:[%s2 + $0x38] sm:$0xf]
    %v356 = vld [vmem:[%s2 + $0x3c] sm:$0xf]
    %v373 = vunpack.c.l.b16 %v341
    %v374 = vunpack.c.l.b16 %v342
    %v375 = vunpack.c.l.b16 %v343
    %v376 = vunpack.c.l.b16 %v344
    %v377 = vunpack.c.l.b16 %v345
    %v378 = vunpack.c.l.b16 %v346
    %v379 = vunpack.c.l.b16 %v347
    %v380 = vunpack.c.l.b16 %v348
    %v381 = vunpack.c.l.b16 %v349
    %v382 = vunpack.c.l.b16 %v350
    %v383 = vunpack.c.l.b16 %v351
    %v384 = vunpack.c.l.b16 %v352
    %v385 = vunpack.c.l.b16 %v353
    %v386 = vunpack.c.l.b16 %v354
    %v387 = vunpack.c.l.b16 %v355
    %v388 = vunpack.c.l.b16 %v356
    %v389 = vpack.c.b16 %v374, %v373
    %v390 = vpack.c.b16 %v376, %v375
    %v391 = vpack.c.b16 %v378, %v377
    %v392 = vpack.c.b16 %v380, %v379
    %v393 = vpack.c.b16 %v382, %v381
    %v394 = vpack.c.b16 %v384, %v383
    %v395 = vpack.c.b16 %v386, %v385
    %v396 = vpack.c.b16 %v388, %v387
    %v405 = vld [vmem:[%s3] sm:$0xf]
    %v406 = vld [vmem:[%s3 + $0x4] sm:$0xf]
    %v407 = vld [vmem:[%s3 + $0x8] sm:$0xf]
    %v408 = vld [vmem:[%s3 + $0xc] sm:$0xf]
    %v409 = vld [vmem:[%s3 + $0x10] sm:$0xf]
    %v410 = vld [vmem:[%s3 + $0x14] sm:$0xf]
    %v411 = vld [vmem:[%s3 + $0x18] sm:$0xf]
    %v412 = vld [vmem:[%s3 + $0x1c] sm:$0xf]
    %v413 = vld [vmem:[%s3 + $0x20] sm:$0xf]
    %v414 = vld [vmem:[%s3 + $0x24] sm:$0xf]
    %v415 = vld [vmem:[%s3 + $0x28] sm:$0xf]
    %v416 = vld [vmem:[%s3 + $0x2c] sm:$0xf]
    %v417 = vld [vmem:[%s3 + $0x30] sm:$0xf]
    %v418 = vld [vmem:[%s3 + $0x34] sm:$0xf]
    %v419 = vld [vmem:[%s3 + $0x38] sm:$0xf]
    %v420 = vld [vmem:[%s3 + $0x3c] sm:$0xf]
    %v421 = vld [vmem:[%s3 + $0x40] sm:$0xf]
    %v422 = vld [vmem:[%s3 + $0x44] sm:$0xf]
    %v423 = vld [vmem:[%s3 + $0x48] sm:$0xf]
    %v424 = vld [vmem:[%s3 + $0x4c] sm:$0xf]
    %v425 = vld [vmem:[%s3 + $0x50] sm:$0xf]
    %v426 = vld [vmem:[%s3 + $0x54] sm:$0xf]
    %v427 = vld [vmem:[%s3 + $0x58] sm:$0xf]
    %v428 = vld [vmem:[%s3 + $0x5c] sm:$0xf]
    %v429 = vld [vmem:[%s3 + $0x60] sm:$0xf]
    %v430 = vld [vmem:[%s3 + $0x64] sm:$0xf]
    %v431 = vld [vmem:[%s3 + $0x68] sm:$0xf]
    %v432 = vld [vmem:[%s3 + $0x6c] sm:$0xf]
    %v433 = vld [vmem:[%s3 + $0x70] sm:$0xf]
    %v434 = vld [vmem:[%s3 + $0x74] sm:$0xf]
    %v435 = vld [vmem:[%s3 + $0x78] sm:$0xf]
    %v436 = vld [vmem:[%s3 + $0x7c] sm:$0xf]
    %v437 = vld [vmem:[%s4] sm:$0x1]
    %v439 = vlaneseq
    %v440 = vshrl.u32 %v439, 7
    %v441 = vsub.s32 0, %v440
    %v442 = vrot.slane %v437, %v441
    %v476 = vunpack.c.l.b16 %v405
    %v477 = vunpack.c.l.b16 %v406
    %v478 = vunpack.c.l.b16 %v407
    %v479 = vunpack.c.l.b16 %v408
    %v480 = vunpack.c.l.b16 %v409
    %v481 = vunpack.c.l.b16 %v410
    %v482 = vunpack.c.l.b16 %v411
    %v483 = vunpack.c.l.b16 %v412
    %v484 = vunpack.c.l.b16 %v413
    %v485 = vunpack.c.l.b16 %v414
    %v486 = vunpack.c.l.b16 %v415
    %v487 = vunpack.c.l.b16 %v416
    %v488 = vunpack.c.l.b16 %v417
    %v489 = vunpack.c.l.b16 %v418
    %v490 = vunpack.c.l.b16 %v419
    %v491 = vunpack.c.l.b16 %v420
    %v492 = vunpack.c.l.b16 %v421
    %v493 = vunpack.c.l.b16 %v422
    %v494 = vunpack.c.l.b16 %v423
    %v495 = vunpack.c.l.b16 %v424
    %v496 = vunpack.c.l.b16 %v425
    %v497 = vunpack.c.l.b16 %v426
    %v498 = vunpack.c.l.b16 %v427
    %v499 = vunpack.c.l.b16 %v428
    %v500 = vunpack.c.l.b16 %v429
    %v501 = vunpack.c.l.b16 %v430
    %v502 = vunpack.c.l.b16 %v431
    %v503 = vunpack.c.l.b16 %v432
    %v504 = vunpack.c.l.b16 %v433
    %v505 = vunpack.c.l.b16 %v434
    %v506 = vunpack.c.l.b16 %v435
    %v507 = vunpack.c.l.b16 %v436
    %v508 = vpack.c.b16 %v477, %v476
    %v509 = vpack.c.b16 %v479, %v478
    %v510 = vpack.c.b16 %v481, %v480
    %v511 = vpack.c.b16 %v483, %v482
    %v512 = vpack.c.b16 %v485, %v484
    %v513 = vpack.c.b16 %v487, %v486
    %v514 = vpack.c.b16 %v489, %v488
    %v515 = vpack.c.b16 %v491, %v490
    %v516 = vpack.c.b16 %v493, %v492
    %v517 = vpack.c.b16 %v495, %v494
    %v518 = vpack.c.b16 %v497, %v496
    %v519 = vpack.c.b16 %v499, %v498
    %v520 = vpack.c.b16 %v501, %v500
    %v521 = vpack.c.b16 %v503, %v502
    %v522 = vpack.c.b16 %v505, %v504
    %v523 = vpack.c.b16 %v507, %v506
    %540 = vmatprep.subr.bf16.mxu0 0
    %541 = vmatpush1.bf16.msra.mxu0 %v515
    %542 = vmatprep.subr.bf16.mxu0 0
    %543 = vmatpush1.bf16.msra.mxu0 %v514
    %544 = vmatprep.subr.bf16.mxu0 0
    %545 = vmatpush1.bf16.msra.mxu0 %v513
    %546 = vmatprep.subr.bf16.mxu0 0
    %547 = vmatpush1.bf16.msra.mxu0 %v512
    %548 = vmatprep.subr.bf16.mxu0 0
    %549 = vmatpush1.bf16.msra.mxu0 %v511
    %550 = vmatprep.subr.bf16.mxu0 0
    %551 = vmatpush1.bf16.msra.mxu0 %v510
    %552 = vmatprep.subr.bf16.mxu0 0
    %553 = vmatpush1.bf16.msra.mxu0 %v509
    %554 = vmatprep.subr.bf16.mxu0 0
    %555 = vmatpush1.bf16.msra.mxu0 %v508
    %556 = vmatprep.subr.bf16.mxu0 0
    %557 = vmatpush2.bf16.msra.mxu0 %v523
    %558 = vmatprep.subr.bf16.mxu0 0
    %559 = vmatpush2.bf16.msra.mxu0 %v522
    %560 = vmatprep.subr.bf16.mxu0 0
    %561 = vmatpush2.bf16.msra.mxu0 %v521
    %562 = vmatprep.subr.bf16.mxu0 0
    %563 = vmatpush2.bf16.msra.mxu0 %v520
    %564 = vmatprep.subr.bf16.mxu0 0
    %565 = vmatpush2.bf16.msra.mxu0 %v519
    %566 = vmatprep.subr.bf16.mxu0 0
    %567 = vmatpush2.bf16.msra.mxu0 %v518
    %568 = vmatprep.subr.bf16.mxu0 0
    %569 = vmatpush2.bf16.msra.mxu0 %v517
    %570 = vmatprep.subr.bf16.mxu0 0
    %571 = vmatpush2.bf16.msra.mxu0 %v516
    %572 = vmatprep.mubr.bf16.mxu0 %v389
    %573 = vmatmul.mubr.bf16.gmra.mxu0 %v333
    %v574 = vpop.f32.mrf.mxu0
    %v575 = vadd.f32 %v442, %v574
    %v576 = vpop.f32.mrf.mxu0
    %v577 = vpop.f32.mrf.mxu0
    %v578 = vadd.f32 %v442, %v577
    %v579 = vpop.f32.mrf.mxu0
    %580 = vmatprep.mubr.bf16.mxu0 %v390
    %581 = vmatmul.mubr.bf16.gmra.mxu0 %v334
    %v582 = vpop.f32.mrf.mxu0
    %v583 = vadd.f32 %v442, %v582
    %v584 = vpop.f32.mrf.mxu0
    %v585 = vpop.f32.mrf.mxu0
    %v586 = vadd.f32 %v442, %v585
    %v587 = vpop.f32.mrf.mxu0
    %588 = vmatprep.mubr.bf16.mxu0 %v391
    %589 = vmatmul.mubr.bf16.gmra.mxu0 %v335
    %v590 = vpop.f32.mrf.mxu0
    %v591 = vadd.f32 %v442, %v590
    %v592 = vpop.f32.mrf.mxu0
    %v593 = vpop.f32.mrf.mxu0
    %v594 = vadd.f32 %v442, %v593
    %v595 = vpop.f32.mrf.mxu0
    %596 = vmatprep.mubr.bf16.mxu0 %v392
    %597 = vmatmul.mubr.bf16.gmra.mxu0 %v336
    %v598 = vpop.f32.mrf.mxu0
    %v599 = vadd.f32 %v442, %v598
    %v600 = vpop.f32.mrf.mxu0
    %v601 = vpop.f32.mrf.mxu0
    %v602 = vadd.f32 %v442, %v601
    %v603 = vpop.f32.mrf.mxu0
    %604 = vmatprep.mubr.bf16.mxu0 %v393
    %605 = vmatmul.mubr.bf16.gmra.mxu0 %v337
    %v606 = vpop.f32.mrf.mxu0
    %v607 = vadd.f32 %v442, %v606
    %v608 = vpop.f32.mrf.mxu0
    %v609 = vpop.f32.mrf.mxu0
    %v610 = vadd.f32 %v442, %v609
    %v611 = vpop.f32.mrf.mxu0
    %612 = vmatprep.mubr.bf16.mxu0 %v394
    %613 = vmatmul.mubr.bf16.gmra.mxu0 %v338
    %v614 = vpop.f32.mrf.mxu0
    %v615 = vadd.f32 %v442, %v614
    %v616 = vpop.f32.mrf.mxu0
    %v617 = vpop.f32.mrf.mxu0
    %v618 = vadd.f32 %v442, %v617
    %v619 = vpop.f32.mrf.mxu0
    %620 = vmatprep.mubr.bf16.mxu0 %v395
    %621 = vmatmul.mubr.bf16.gmra.mxu0 %v339
    %v622 = vpop.f32.mrf.mxu0
    %v623 = vadd.f32 %v442, %v622
    %v624 = vpop.f32.mrf.mxu0
    %v625 = vpop.f32.mrf.mxu0
    %v626 = vadd.f32 %v442, %v625
    %v627 = vpop.f32.mrf.mxu0
    %628 = vmatprep.mubr.bf16.mxu0 %v396
    %629 = vmatmul.mubr.bf16.gmra.mxu0 %v340
    %v630 = vpop.f32.mrf.mxu0
    %v631 = vadd.f32 %v442, %v630
    %v632 = vpop.f32.mrf.mxu0
    %v633 = vpop.f32.mrf.mxu0
    %v634 = vadd.f32 %v442, %v633
    %v635 = vpop.f32.mrf.mxu0
    %636 = vdwg.mxu0
    %v637 = vmax.f32 %v575, 0.0
    %v638 = vmax.f32 %v578, 0.0
    %v639 = vmax.f32 %v583, 0.0
    %v640 = vmax.f32 %v586, 0.0
    %v641 = vmax.f32 %v591, 0.0
    %v642 = vmax.f32 %v594, 0.0
    %v643 = vmax.f32 %v599, 0.0
    %v644 = vmax.f32 %v602, 0.0
    %v645 = vmax.f32 %v607, 0.0
    %v646 = vmax.f32 %v610, 0.0
    %v647 = vmax.f32 %v615, 0.0
    %v648 = vmax.f32 %v618, 0.0
    %v649 = vmax.f32 %v623, 0.0
    %v650 = vmax.f32 %v626, 0.0
    %v651 = vmax.f32 %v631, 0.0
    %v652 = vmax.f32 %v634, 0.0
    %v653 = vpack.c.bf16 %v638, %v637
    %v654 = vpack.c.bf16 %v640, %v639
    %v655 = vpack.c.bf16 %v642, %v641
    %v656 = vpack.c.bf16 %v644, %v643
    %v657 = vpack.c.bf16 %v646, %v645
    %v658 = vpack.c.bf16 %v648, %v647
    %v659 = vpack.c.bf16 %v650, %v649
    %v660 = vpack.c.bf16 %v652, %v651
    %v669 = vunpack.c.l.b16 %v653
    %v670 = vunpack.c.h.b16 %v653
    %v671 = vunpack.c.l.b16 %v654
    %v672 = vunpack.c.h.b16 %v654
    %v673 = vunpack.c.l.b16 %v655
    %v674 = vunpack.c.h.b16 %v655
    %v675 = vunpack.c.l.b16 %v656
    %v676 = vunpack.c.h.b16 %v656
    %v677 = vunpack.c.l.b16 %v657
    %v678 = vunpack.c.h.b16 %v657
    %v679 = vunpack.c.l.b16 %v658
    %v680 = vunpack.c.h.b16 %v658
    %v681 = vunpack.c.l.b16 %v659
    %v682 = vunpack.c.h.b16 %v659
    %v683 = vunpack.c.l.b16 %v660
    %v684 = vunpack.c.h.b16 %v660
    %v685 = vpack.c.b16 %v669, %v669
    %v686 = vpack.c.b16 %v670, %v670
    %v687 = vpack.c.b16 %v671, %v671
    %v688 = vpack.c.b16 %v672, %v672
    %v689 = vpack.c.b16 %v673, %v673
    %v690 = vpack.c.b16 %v674, %v674
    %v691 = vpack.c.b16 %v675, %v675
    %v692 = vpack.c.b16 %v676, %v676
    %v693 = vpack.c.b16 %v677, %v677
    %v694 = vpack.c.b16 %v678, %v678
    %v695 = vpack.c.b16 %v679, %v679
    %v696 = vpack.c.b16 %v680, %v680
    %v697 = vpack.c.b16 %v681, %v681
    %v698 = vpack.c.b16 %v682, %v682
    %v699 = vpack.c.b16 %v683, %v683
    %v700 = vpack.c.b16 %v684, %v684
    %717 = vst [vmem:[%s5] sm:$0xf] %v685
    %718 = vst [vmem:[%s5 + $0x4] sm:$0xf] %v686
    %719 = vst [vmem:[%s5 + $0x8] sm:$0xf] %v687
    %720 = vst [vmem:[%s5 + $0xc] sm:$0xf] %v688
    %721 = vst [vmem:[%s5 + $0x10] sm:$0xf] %v689
    %722 = vst [vmem:[%s5 + $0x14] sm:$0xf] %v690
    %723 = vst [vmem:[%s5 + $0x18] sm:$0xf] %v691
    %724 = vst [vmem:[%s5 + $0x1c] sm:$0xf] %v692
    %725 = vst [vmem:[%s5 + $0x20] sm:$0xf] %v693
    %726 = vst [vmem:[%s5 + $0x24] sm:$0xf] %v694
    %727 = vst [vmem:[%s5 + $0x28] sm:$0xf] %v695
    %728 = vst [vmem:[%s5 + $0x2c] sm:$0xf] %v696
    %729 = vst [vmem:[%s5 + $0x30] sm:$0xf] %v697
    %730 = vst [vmem:[%s5 + $0x34] sm:$0xf] %v698
    %731 = vst [vmem:[%s5 + $0x38] sm:$0xf] %v699
    %732 = vst [vmem:[%s5 + $0x3c] sm:$0xf] %v700
  $region29: #{sage_forward.3} parent=0 // pred_fallthru
    _
  // Predicated region
  $region30: #{sage_forward.3} parent=0 // pred_check
    _
  $region31: #{sage_forward.3} parent=0 // pred_check_branch
    %734 = sbr.rel (0) target = $region33
  $region32: #{sage_forward.3} parent=0 // pred_region
    _
  $region33: #{sage_forward.3} parent=0 // pred_fallthru
    _
  // Predicated region
  $region34: #{sage_forward.3} parent=0 // pred_check
    _
  $region35: #{sage_forward.3} parent=0 // pred_check_branch
    %736 = sbr.rel (0) target = $region37
  $region36: #{sage_forward.3} parent=0 // pred_region
    _
  $region37: #{sage_forward.3} parent=0 // pred_fallthru
    _

</llo_original>
